<compile_context>
chip_gen: v7x
topology: tpu7x:2x2x1
jax: 0.10.0
libtpu: 0.0.40
codegen_flags: <defaults>
</compile_context>

<pallas_src>
import functools

import jax
import jax.numpy as jnp
from jax import lax
from jax.experimental import pallas as pl
from jax.experimental.pallas import tpu as pltpu

NUM_RES = 6      # matches PE(num_res=6); no learnable parameters
LANES = 128      # vreg lane width


def _pe_kernel(x_ref, o_ref, *, num_res: int, chunk: int):
    """x_ref: (tm, 128) VMEM tile.  o_ref: (1 + 2*num_res, tm, 128) VMEM tile."""
    nchunks = x_ref.shape[0] // chunk

    def body(i, carry):
        r0 = pl.multiple_of(i * chunk, chunk)
        x = x_ref[pl.ds(r0, chunk), :].astype(jnp.float32)
        o_ref[0, pl.ds(r0, chunk), :] = x.astype(o_ref.dtype)      # passthrough
        if num_res > 0:
            # Base octave: the only polynomial sin/cos evaluations (VALU).
            s = jnp.sin(x)
            c = jnp.cos(x)
            o_ref[1, pl.ds(r0, chunk), :] = s.astype(o_ref.dtype)
            o_ref[2, pl.ds(r0, chunk), :] = c.astype(o_ref.dtype)
            for r in range(1, num_res):
                # Angle doubling: sin(2a) = 2 sin a cos a, cos(2a) = 1 - 2 sin^2 a.
                s, c = 2.0 * s * c, 1.0 - 2.0 * s * s
                o_ref[1 + 2 * r, pl.ds(r0, chunk), :] = s.astype(o_ref.dtype)
                o_ref[2 + 2 * r, pl.ds(r0, chunk), :] = c.astype(o_ref.dtype)
        return carry

    lax.fori_loop(0, nchunks, body, 0)


def _round_up(v: int, m: int) -> int:
    return ((v + m - 1) // m) * m


def _default_tm() -> int:
    # v5e (~0.8 TB/s HBM) is purely write-bound: a bigger tile amortizes the
    # per-step overhead and the 13 output DMA descriptors.  512 elsewhere
    # (more grid steps for 2-TC sharding on v7x; plenty of VMEM headroom).
    try:
        kind = jax.devices()[0].device_kind.lower()
    except Exception:
        return 512
    if ("v5e" in kind or "v5 lite" in kind or "v5litepod" in kind):
        return 1024
    return 512


def pe_forward(x: jax.Array, num_res: int = NUM_RES, *, tm: int | None = None,
               out_dtype=None, interleaved: bool = True) -> jax.Array:
    """Positional encoding matching the PyTorch PE module.

    interleaved=True  -> [..., (1+2*num_res)*D] in torch.cat order (default).
    interleaved=False -> stacked [(1+2*num_res), ..., D] layout (skips the
                         wrapper transpose pass; ~2-3x less HBM traffic).
    """
    orig_shape = x.shape
    D = orig_shape[-1]
    C = 1 + 2 * num_res
    T = x.size                    # total flat element count
    N = T // D                    # product of leading dims
    out_dtype = x.dtype if out_dtype is None else out_dtype

    # Lane-dense flat view: [M, 128].  Pad only the flat element count up to a
    # multiple of 16 rows (2048 elements); ragged last blocks are masked by
    # Pallas, so no rounding to tm (and no pad copy for aligned inputs).
    m_needed = pl.cdiv(T, LANES)
    M = _round_up(m_needed, 16)

    if tm is None:
        tm = _default_tm()
    # Shrink the row tile for small inputs (aim for >= 4 grid steps when
    # possible, >= 2 for v7x megacore) and keep it a multiple of 16 sublanes.
    tm = max(16, min(tm, _round_up(pl.cdiv(m_needed, 4), 16)))
    chunk = 32 if tm % 32 == 0 else 16   # in-kernel row chunk (live-range bound)

    x_flat = x.reshape(-1)
    pad = M * LANES - T
    if pad:
        x_flat = jnp.pad(x_flat, (0, pad))
    x2 = x_flat.reshape(M, LANES)

    kernel = functools.partial(_pe_kernel, num_res=num_res, chunk=chunk)

    out = pl.pallas_call(
        kernel,
        out_shape=jax.ShapeDtypeStruct((C, M, LANES), out_dtype),
        grid_spec=pltpu.PrefetchScalarGridSpec(
            num_scalar_prefetch=0,
            grid=(pl.cdiv(M, tm),),
            in_specs=[pl.BlockSpec((tm, LANES), lambda i: (i, 0))],
            out_specs=pl.BlockSpec((C, tm, LANES), lambda i: (0, i, 0)),
        ),
        compiler_params=pltpu.CompilerParams(
            dimension_semantics=("parallel",),
            vmem_limit_bytes=32 * 1024 * 1024,
        ),
    )(x2)

    out = out.reshape(C, M * LANES)[:, :T]
    if not interleaved:
        # Stacked [C, ..., D] layout: no transpose pass at all.
        return out.reshape((C,) + orig_shape)
    # Exact PyTorch concat layout [..., x | sin0 | cos0 | ... ]: one fused
    # slice + transpose pass in the wrapper.
    out = out.reshape(C, N, D).transpose(1, 0, 2)
    return out.reshape(orig_shape[:-1] + (C * D,))


def pe_reference(x: jax.Array, num_res: int = NUM_RES) -> jax.Array:
    outs = [x]
    for r in range(num_res):
        outs.append(jnp.sin(x * 2 ** r))
        outs.append(jnp.cos(x * 2 ** r))
    return jnp.concatenate(outs, axis=-1)


if __name__ == "__main__":
    key = jax.random.PRNGKey(0)
    # Coordinate-style input: batch=2, seq=128, feat=4.
    x = jax.random.normal(key, (2, 128, 4), dtype=jnp.float32)
    C = 1 + 2 * NUM_RES

    ref = pe_reference(x)

    # Default (torch-layout) path.  Tolerance 2e-4 covers the angle-doubling
    # recurrence error growth (~2^r per octave, ~1e-5 worst case at r=5).
    out = jax.block_until_ready(pe_forward(x))
    assert out.shape == (2, 128, 4 * C), out.shape
    assert jnp.allclose(out, ref, atol=2e-4, rtol=2e-4), "mismatch vs reference"

    # Stacked (transpose-free) layout option.
    out_stacked = jax.block_until_ready(pe_forward(x, interleaved=False))
    ref_stacked = jnp.moveaxis(ref.reshape(2, 128, C, 4), -2, 0)
    assert out_stacked.shape == (C, 2, 128, 4), out_stacked.shape
    assert jnp.allclose(out_stacked, ref_stacked, atol=2e-4, rtol=2e-4), \
        "stacked layout mismatch vs reference"

    print("KERNEL_OK")
</pallas_src>

<mosaic_0001>
module attributes {stable_mosaic.version = 11 : i64} {
  func.func @_pe_kernel(%arg0: i32, %arg1: memref<16x128xf32, #tpu.memory_space<vmem>>, %arg2: memref<13x16x128xf32, #tpu.memory_space<vmem>>) attributes {dimension_semantics = [#tpu.dimension_semantics<parallel>], iteration_bounds = array<i64: 1>, scalar_prefetch = 0 : i64, scratch_operands = 0 : i64, tpu.core_type = #tpu.core_type<tc>, window_params = [{transform_indices = @transform_0, window_bounds = array<i64: 16, 128>}, {transform_indices = @transform_1, window_bounds = array<i64: 13, 16, 128>}]} {
    %c0_i32 = arith.constant 0 : i32
    %c16_i32 = arith.constant 16 : i32
    %0 = arith.muli %c0_i32, %c16_i32 : i32
    %1 = tpu.assume_multiple %0, 16 : i32
    %2 = arith.index_cast %1 : i32 to index
    %c0 = arith.constant 0 : index
    %3 = vector.load %arg1[%2, %c0] : memref<16x128xf32, #tpu.memory_space<vmem>>, vector<16x128xf32>
    %c0_0 = arith.constant 0 : index
    %4 = arith.index_cast %1 : i32 to index
    %c0_1 = arith.constant 0 : index
    %5 = vector.load %arg2[%c0_0, %4, %c0_1] : memref<13x16x128xf32, #tpu.memory_space<vmem>>, vector<1x16x128xf32>
    %6 = vector.shape_cast %5 : vector<1x16x128xf32> to vector<16x128xf32>
    %7 = vector.shape_cast %3 : vector<16x128xf32> to vector<1x16x128xf32>
    tpu.vector_store %arg2[%c0_0, %4, %c0_1], %7 {strides = array<i32>} : memref<13x16x128xf32, #tpu.memory_space<vmem>>, vector<1x16x128xf32>,
    %8 = math.sin %3 : vector<16x128xf32>
    %9 = math.cos %3 : vector<16x128xf32>
    %c1 = arith.constant 1 : index
    %10 = arith.index_cast %1 : i32 to index
    %c0_2 = arith.constant 0 : index
    %11 = vector.load %arg2[%c1, %10, %c0_2] : memref<13x16x128xf32, #tpu.memory_space<vmem>>, vector<1x16x128xf32>
    %12 = vector.shape_cast %11 : vector<1x16x128xf32> to vector<16x128xf32>
    %13 = vector.shape_cast %8 : vector<16x128xf32> to vector<1x16x128xf32>
    tpu.vector_store %arg2[%c1, %10, %c0_2], %13 {strides = array<i32>} : memref<13x16x128xf32, #tpu.memory_space<vmem>>, vector<1x16x128xf32>,
    %c2 = arith.constant 2 : index
    %14 = arith.index_cast %1 : i32 to index
    %c0_3 = arith.constant 0 : index
    %15 = vector.load %arg2[%c2, %14, %c0_3] : memref<13x16x128xf32, #tpu.memory_space<vmem>>, vector<1x16x128xf32>
    %16 = vector.shape_cast %15 : vector<1x16x128xf32> to vector<16x128xf32>
    %17 = vector.shape_cast %9 : vector<16x128xf32> to vector<1x16x128xf32>
    tpu.vector_store %arg2[%c2, %14, %c0_3], %17 {strides = array<i32>} : memref<13x16x128xf32, #tpu.memory_space<vmem>>, vector<1x16x128xf32>,
    %cst = arith.constant 2.000000e+00 : f32
    %18 = vector.broadcast %cst : f32 to vector<16x128xf32>
    %19 = arith.mulf %18, %8 : vector<16x128xf32>
    %20 = arith.mulf %19, %9 : vector<16x128xf32>
    %cst_4 = arith.constant 2.000000e+00 : f32
    %21 = vector.broadcast %cst_4 : f32 to vector<16x128xf32>
    %22 = arith.mulf %21, %8 : vector<16x128xf32>
    %23 = arith.mulf %22, %8 : vector<16x128xf32>
    %cst_5 = arith.constant 1.000000e+00 : f32
    %24 = vector.broadcast %cst_5 : f32 to vector<16x128xf32>
    %25 = arith.subf %24, %23 : vector<16x128xf32>
    %c3 = arith.constant 3 : index
    %26 = arith.index_cast %1 : i32 to index
    %c0_6 = arith.constant 0 : index
    %27 = vector.load %arg2[%c3, %26, %c0_6] : memref<13x16x128xf32, #tpu.memory_space<vmem>>, vector<1x16x128xf32>
    %28 = vector.shape_cast %27 : vector<1x16x128xf32> to vector<16x128xf32>
    %29 = vector.shape_cast %20 : vector<16x128xf32> to vector<1x16x128xf32>
    tpu.vector_store %arg2[%c3, %26, %c0_6], %29 {strides = array<i32>} : memref<13x16x128xf32, #tpu.memory_space<vmem>>, vector<1x16x128xf32>,
    %c4 = arith.constant 4 : index
    %30 = arith.index_cast %1 : i32 to index
    %c0_7 = arith.constant 0 : index
    %31 = vector.load %arg2[%c4, %30, %c0_7] : memref<13x16x128xf32, #tpu.memory_space<vmem>>, vector<1x16x128xf32>
    %32 = vector.shape_cast %31 : vector<1x16x128xf32> to vector<16x128xf32>
    %33 = vector.shape_cast %25 : vector<16x128xf32> to vector<1x16x128xf32>
    tpu.vector_store %arg2[%c4, %30, %c0_7], %33 {strides = array<i32>} : memref<13x16x128xf32, #tpu.memory_space<vmem>>, vector<1x16x128xf32>,
    %cst_8 = arith.constant 2.000000e+00 : f32
    %34 = vector.broadcast %cst_8 : f32 to vector<16x128xf32>
    %35 = arith.mulf %34, %20 : vector<16x128xf32>
    %36 = arith.mulf %35, %25 : vector<16x128xf32>
    %cst_9 = arith.constant 2.000000e+00 : f32
    %37 = vector.broadcast %cst_9 : f32 to vector<16x128xf32>
    %38 = arith.mulf %37, %20 : vector<16x128xf32>
    %39 = arith.mulf %38, %20 : vector<16x128xf32>
    %cst_10 = arith.constant 1.000000e+00 : f32
    %40 = vector.broadcast %cst_10 : f32 to vector<16x128xf32>
    %41 = arith.subf %40, %39 : vector<16x128xf32>
    %c5 = arith.constant 5 : index
    %42 = arith.index_cast %1 : i32 to index
    %c0_11 = arith.constant 0 : index
    %43 = vector.load %arg2[%c5, %42, %c0_11] : memref<13x16x128xf32, #tpu.memory_space<vmem>>, vector<1x16x128xf32>
    %44 = vector.shape_cast %43 : vector<1x16x128xf32> to vector<16x128xf32>
    %45 = vector.shape_cast %36 : vector<16x128xf32> to vector<1x16x128xf32>
    tpu.vector_store %arg2[%c5, %42, %c0_11], %45 {strides = array<i32>} : memref<13x16x128xf32, #tpu.memory_space<vmem>>, vector<1x16x128xf32>,
    %c6 = arith.constant 6 : index
    %46 = arith.index_cast %1 : i32 to index
    %c0_12 = arith.constant 0 : index
    %47 = vector.load %arg2[%c6, %46, %c0_12] : memref<13x16x128xf32, #tpu.memory_space<vmem>>, vector<1x16x128xf32>
    %48 = vector.shape_cast %47 : vector<1x16x128xf32> to vector<16x128xf32>
    %49 = vector.shape_cast %41 : vector<16x128xf32> to vector<1x16x128xf32>
    tpu.vector_store %arg2[%c6, %46, %c0_12], %49 {strides = array<i32>} : memref<13x16x128xf32, #tpu.memory_space<vmem>>, vector<1x16x128xf32>,
    %cst_13 = arith.constant 2.000000e+00 : f32
    %50 = vector.broadcast %cst_13 : f32 to vector<16x128xf32>
    %51 = arith.mulf %50, %36 : vector<16x128xf32>
    %52 = arith.mulf %51, %41 : vector<16x128xf32>
    %cst_14 = arith.constant 2.000000e+00 : f32
    %53 = vector.broadcast %cst_14 : f32 to vector<16x128xf32>
    %54 = arith.mulf %53, %36 : vector<16x128xf32>
    %55 = arith.mulf %54, %36 : vector<16x128xf32>
    %cst_15 = arith.constant 1.000000e+00 : f32
    %56 = vector.broadcast %cst_15 : f32 to vector<16x128xf32>
    %57 = arith.subf %56, %55 : vector<16x128xf32>
    %c7 = arith.constant 7 : index
    %58 = arith.index_cast %1 : i32 to index
    %c0_16 = arith.constant 0 : index
    %59 = vector.load %arg2[%c7, %58, %c0_16] : memref<13x16x128xf32, #tpu.memory_space<vmem>>, vector<1x16x128xf32>
    %60 = vector.shape_cast %59 : vector<1x16x128xf32> to vector<16x128xf32>
    %61 = vector.shape_cast %52 : vector<16x128xf32> to vector<1x16x128xf32>
    tpu.vector_store %arg2[%c7, %58, %c0_16], %61 {strides = array<i32>} : memref<13x16x128xf32, #tpu.memory_space<vmem>>, vector<1x16x128xf32>,
    %c8 = arith.constant 8 : index
    %62 = arith.index_cast %1 : i32 to index
    %c0_17 = arith.constant 0 : index
    %63 = vector.load %arg2[%c8, %62, %c0_17] : memref<13x16x128xf32, #tpu.memory_space<vmem>>, vector<1x16x128xf32>
    %64 = vector.shape_cast %63 : vector<1x16x128xf32> to vector<16x128xf32>
    %65 = vector.shape_cast %57 : vector<16x128xf32> to vector<1x16x128xf32>
    tpu.vector_store %arg2[%c8, %62, %c0_17], %65 {strides = array<i32>} : memref<13x16x128xf32, #tpu.memory_space<vmem>>, vector<1x16x128xf32>,
    %cst_18 = arith.constant 2.000000e+00 : f32
    %66 = vector.broadcast %cst_18 : f32 to vector<16x128xf32>
    %67 = arith.mulf %66, %52 : vector<16x128xf32>
    %68 = arith.mulf %67, %57 : vector<16x128xf32>
    %cst_19 = arith.constant 2.000000e+00 : f32
    %69 = vector.broadcast %cst_19 : f32 to vector<16x128xf32>
    %70 = arith.mulf %69, %52 : vector<16x128xf32>
    %71 = arith.mulf %70, %52 : vector<16x128xf32>
    %cst_20 = arith.constant 1.000000e+00 : f32
    %72 = vector.broadcast %cst_20 : f32 to vector<16x128xf32>
    %73 = arith.subf %72, %71 : vector<16x128xf32>
    %c9 = arith.constant 9 : index
    %74 = arith.index_cast %1 : i32 to index
    %c0_21 = arith.constant 0 : index
    %75 = vector.load %arg2[%c9, %74, %c0_21] : memref<13x16x128xf32, #tpu.memory_space<vmem>>, vector<1x16x128xf32>
    %76 = vector.shape_cast %75 : vector<1x16x128xf32> to vector<16x128xf32>
    %77 = vector.shape_cast %68 : vector<16x128xf32> to vector<1x16x128xf32>
    tpu.vector_store %arg2[%c9, %74, %c0_21], %77 {strides = array<i32>} : memref<13x16x128xf32, #tpu.memory_space<vmem>>, vector<1x16x128xf32>,
    %c10 = arith.constant 10 : index
    %78 = arith.index_cast %1 : i32 to index
    %c0_22 = arith.constant 0 : index
    %79 = vector.load %arg2[%c10, %78, %c0_22] : memref<13x16x128xf32, #tpu.memory_space<vmem>>, vector<1x16x128xf32>
    %80 = vector.shape_cast %79 : vector<1x16x128xf32> to vector<16x128xf32>
    %81 = vector.shape_cast %73 : vector<16x128xf32> to vector<1x16x128xf32>
    tpu.vector_store %arg2[%c10, %78, %c0_22], %81 {strides = array<i32>} : memref<13x16x128xf32, #tpu.memory_space<vmem>>, vector<1x16x128xf32>,
    %cst_23 = arith.constant 2.000000e+00 : f32
    %82 = vector.broadcast %cst_23 : f32 to vector<16x128xf32>
    %83 = arith.mulf %82, %68 : vector<16x128xf32>
    %84 = arith.mulf %83, %73 : vector<16x128xf32>
    %cst_24 = arith.constant 2.000000e+00 : f32
    %85 = vector.broadcast %cst_24 : f32 to vector<16x128xf32>
    %86 = arith.mulf %85, %68 : vector<16x128xf32>
    %87 = arith.mulf %86, %68 : vector<16x128xf32>
    %cst_25 = arith.constant 1.000000e+00 : f32
    %88 = vector.broadcast %cst_25 : f32 to vector<16x128xf32>
    %89 = arith.subf %88, %87 : vector<16x128xf32>
    %c11 = arith.constant 11 : index
    %90 = arith.index_cast %1 : i32 to index
    %c0_26 = arith.constant 0 : index
    %91 = vector.load %arg2[%c11, %90, %c0_26] : memref<13x16x128xf32, #tpu.memory_space<vmem>>, vector<1x16x128xf32>
    %92 = vector.shape_cast %91 : vector<1x16x128xf32> to vector<16x128xf32>
    %93 = vector.shape_cast %84 : vector<16x128xf32> to vector<1x16x128xf32>
    tpu.vector_store %arg2[%c11, %90, %c0_26], %93 {strides = array<i32>} : memref<13x16x128xf32, #tpu.memory_space<vmem>>, vector<1x16x128xf32>,
    %c12 = arith.constant 12 : index
    %94 = arith.index_cast %1 : i32 to index
    %c0_27 = arith.constant 0 : index
    %95 = vector.load %arg2[%c12, %94, %c0_27] : memref<13x16x128xf32, #tpu.memory_space<vmem>>, vector<1x16x128xf32>
    %96 = vector.shape_cast %95 : vector<1x16x128xf32> to vector<16x128xf32>
    %97 = vector.shape_cast %89 : vector<16x128xf32> to vector<1x16x128xf32>
    tpu.vector_store %arg2[%c12, %94, %c0_27], %97 {strides = array<i32>} : memref<13x16x128xf32, #tpu.memory_space<vmem>>, vector<1x16x128xf32>,
    %c1_i32 = arith.constant 1 : i32
    return
  }
  func.func @transform_0(%arg0: i32) -> (i32, i32) {
    %c0_i32 = arith.constant 0 : i32
    %c0_i32_0 = arith.constant 0 : i32
    return %arg0, %c0_i32 : i32, i32
  }
  func.func @transform_1(%arg0: i32) -> (i32, i32, i32) {
    %c0_i32 = arith.constant 0 : i32
    %c0_i32_0 = arith.constant 0 : i32
    %c0_i32_1 = arith.constant 0 : i32
    return %c0_i32, %arg0, %c0_i32_0 : i32, i32, i32
  }
}

</mosaic_0001>

<llo_original>
// kernel: tpu_custom_call.1
$region0: #{tpu_custom_call.1}
  #allocation0 [shape = 'u32[]', space=smem, size = 0x4, offset = 0x4, fixed_abs, tag = 'smem constant byte address 0x4 - core index']
  #allocation1 [shape = 'u32[144,128]{1,0:T(1,128)}', space=vmem, size = 0x12000, scoped, tag = 'internal scratch']
  %s0 = inlined_call_operand.hbm [shape: f32[16,128], index: 0, kind: input, shape index: {}]
  %s1 = inlined_call_operand.hbm [shape: f32[13,16,128], index: 1, kind: output, shape index: {}]
  %s2 = sld [smem:[#allocation0]]
  $region18: #{tpu_custom_call.1} parent=0
    _
  %s4 = ssub.s32 1, %s2
  %s5 = scalar_select 0, %s4, %s2
  $region1: #{tpu_custom_call.1} parent=0
    #allocation2 [shape = 'u8[8192]{0}', space=vmem, size = 0x2000, scoped, tag = 'input window, operand 0, single buffered']
    #allocation3 [shape = 's32[1]{0}', space=sflag, size = 0x4, scoped, tag = 'scoped memory for tpu_custom_call.1']
    #allocation4 [shape = 's32[1]{0}', space=sflag, size = 0x4, scoped, tag = 'scoped memory for tpu_custom_call.1']
    #allocation5 [shape = 'u8[106496]{0}', space=vmem, size = 0x1a000, scoped, tag = 'output window, operand 0, single buffered']
    %6 = vsyncpa [#allocation3], 0
    %7 = vsyncpa [#allocation4], 0
    // Predicated region
    $region2: #{tpu_custom_call.1} parent=1 // pred_check
      _
    $region3: #{tpu_custom_call.1} parent=1 // pred_check_branch
      %9 = sbr.rel (0) target = $region5
    $region4: #{tpu_custom_call.1} parent=1 // pred_region
      %s11 = ssub.s32 256, 256
      %12 = vsyncadd [#allocation3], %s11
      %s13 = sshll.u32 [#allocation2], 4
      %s14 = int_to_ptr.vmem [resolvable:$true] %s13
      %19 = dma.hbm_to_vmem [thread:$0]  %s0, 256, %s14, [#allocation3], 128, 128, 8
    $region5: #{tpu_custom_call.1} parent=1 // pred_fallthru
      _
    // Predicated region
    $region6: #{tpu_custom_call.1} parent=1 // pred_check
      _
    $region7: #{tpu_custom_call.1} parent=1 // pred_check_branch
      %21 = sbr.rel (0) target = $region9
    $region8: #{tpu_custom_call.1} parent=1 // pred_region
      %22 = dma.done [#allocation3], 256
    $region9: #{tpu_custom_call.1} parent=1 // pred_fallthru
      _
    %v23 = vld [vmem:[#allocation2] sm:$0xff]
    %v24 = vld [vmem:[#allocation2 + $0x8] sm:$0xff]
    %25 = vst [vmem:[#allocation5] sm:$0xff] %v23
    %26 = vst [vmem:[#allocation5 + $0x8] sm:$0xff] %v24
    %v27 = vand.u32 2147483647, %v23
    %vm28 = vcmp.le.f32.partialorder %v27, 0.7853982
    %vm29 = vcmp.lt.s32.totalorder %v23, 0
    %v30 = vand.u32 %v23, 2139095040
    %v31 = vshrl.u32 %v30, 23
    %v32 = vsub.s32 %v31, 127
    %v33 = vand.u32 2147483647, %v23
    %v34 = vand.u32 %v33, 8388607
    %v35 = vor.u32 %v34, 8388608
    %v36 = vsub.s32 0, %v35
    %v37 = vadd.s32 %v32, 1
    %vm38 = vcmp.gt.s32.totalorder %v37, 0
    %v39 = vsel %vm38, %v37, 0
    %v40 = vshrl.u32 %v39, 5
    %v41 = vand.u32 %v39, 31
    %v42 = vsub.s32 32, %v41
    %v43 = vshrl.u32 683565275, %v42
    %v44 = vshll.u32 683565275, %v41
    %v45 = vshrl.u32 2475754826, %v42
    %v46 = vor.u32 %v44, %v45
    %v47 = vshll.u32 2475754826, %v41
    %v48 = vshrl.u32 2131351028, %v42
    %v49 = vor.u32 %v47, %v48
    %v50 = vshll.u32 2131351028, %v41
    %v51 = vshrl.u32 2102212464, %v42
    %v52 = vor.u32 %v50, %v51
    %v53 = vshll.u32 2102212464, %v41
    %v54 = vshrl.u32 920167782, %v42
    %v55 = vor.u32 %v53, %v54
    %v56 = vshll.u32 920167782, %v41
    %v57 = vshrl.u32 1326507024, %v42
    %v58 = vor.u32 %v56, %v57
    %vm59 = vcmp.lt.s32.totalorder %v40, 1
    %vm60 = vcmp.lt.s32.totalorder %v40, 2
    %vm61 = vcmp.lt.s32.totalorder %v40, 3
    %vm62 = vcmp.lt.s32.totalorder %v40, 4
    %v63 = vsel %vm59, %v43, %v46
    %v64 = vsel %vm62, %v52, 2102212464
    %v65 = vsel %vm61, %v49, %v64
    %v66 = vsel %vm60, %v63, %v65
    %v67 = vsel %vm59, %v46, %v49
    %v68 = vsel %vm62, %v55, 920167782
    %v69 = vsel %vm61, %v52, %v68
    %v70 = vsel %vm60, %v67, %v69
    %v71 = vsel %vm59, %v49, %v52
    %v72 = vsel %vm62, %v58, 1326507024
    %v73 = vsel %vm61, %v55, %v72
    %v74 = vsel %vm60, %v71, %v73
    %v75 = vshll.u32 %v35, 8
    %v76 = vmul.u32.u64.compose %v75, %v74
    %v77 = vextract.low.u32 %v76
    %v78 = vextract.high.u32 %v76
    %v79 = vmul.u32.u64.compose %v75, %v70
    %v80 = vextract.low.u32 %v79
    %v81 = vextract.high.u32 %v79
    %v82 = vmul.u32 %v75, %v66
    %v83 = vadd.s32 %v78, %v80
    %vm84 = vc.u32 %v78, %v80
    %v85 = vadd.s32 %v81, 1
    %v86 = vsel %vm84, %v85, %v81
    %v87 = vadd.s32 %v82, %v86
    %v88 = vadd.s32 %v87, 536870912
    %v89 = vshrl.u32 %v88, 30
    %v90 = vshll.u32 %v89, 30
    %v91 = vsub.s32 %v87, %v90
    %vm92 = vcmp.lt.s32.totalorder %v91, 0
    %v93 = vsub.s32 0, %v91
    %v94 = vsel %vm92, %v93, %v91
    %v95 = vclz %v94
    %v96 = vsub.s32 %v95, 2
    %vm97 = vcmp.gt.s32.totalorder 0, %v96
    %v98 = vsel %vm97, 0, %v96
    %v99 = vsub.s32 32, %v98
    %v100 = vshll.u32 %v91, %v98
    %v101 = vshrl.u32 %v83, %v99
    %v102 = vor.u32 %v100, %v101
    %v103 = vsub.s32 4294967266, %v98
    %v104 = vadd.s32 %v103, 127
    %v105 = vshll.u32 %v104, 23
    %v106 = vor.u32 4788187, %v105
    %v107 = vand.u32 2147483647, %v106
    %v109 = vcvt.s32.f32 %v102
    %v110 = vmul.f32 %v109, %v107
    %v111 = vxor.u32 %v110, 2147483648
    %v112 = vsel %vm29, %v111, %v110
    %v113 = vsub.s32 4, %v89
    %v114 = vsel %vm29, %v113, %v89
    %v115 = vsel %vm28, %v23, %v112
    %v116 = vsel %vm28, 0, %v114
    %v117 = vcosq.f32.pop %v115
    %v118 = vsinq.f32.pop %v115
    %vm119 = vweird.f32 %v23
    %v120 = vadd.s32 %v116, 3
    %v121 = vand.u32 %v120, 3
    %vm122 = vcmp.lt.s32.totalorder %v121, 2
    %vm123 = vcmp.eq.s32.totalorder %v121, 0
    %v124 = vxor.u32 %v118, 2147483648
    %v125 = vsel %vm123, %v117, %v124
    %vm126 = vcmp.eq.s32.totalorder %v121, 2
    %v127 = vxor.u32 %v117, 2147483648
    %v128 = vsel %vm126, %v127, %v118
    %v129 = vsel %vm122, %v125, %v128
    %v130 = vsel %vm119, nan, %v129
    %v131 = vand.u32 2147483647, %v24
    %vm132 = vcmp.le.f32.partialorder %v131, 0.7853982
    %vm133 = vcmp.lt.s32.totalorder %v24, 0
    %v134 = vand.u32 %v24, 2139095040
    %v135 = vshrl.u32 %v134, 23
    %v136 = vsub.s32 %v135, 127
    %v137 = vand.u32 2147483647, %v24
    %v138 = vand.u32 %v137, 8388607
    %v139 = vor.u32 %v138, 8388608
    %v140 = vsub.s32 0, %v139
    %v141 = vadd.s32 %v136, 1
    %vm142 = vcmp.gt.s32.totalorder %v141, 0
    %v143 = vsel %vm142, %v141, 0
    %v144 = vshrl.u32 %v143, 5
    %v145 = vand.u32 %v143, 31
    %v146 = vsub.s32 32, %v145
    %v147 = vshrl.u32 683565275, %v146
    %v148 = vshll.u32 683565275, %v145
    %v149 = vshrl.u32 2475754826, %v146
    %v150 = vor.u32 %v148, %v149
    %v151 = vshll.u32 2475754826, %v145
    %v152 = vshrl.u32 2131351028, %v146
    %v153 = vor.u32 %v151, %v152
    %v154 = vshll.u32 2131351028, %v145
    %v155 = vshrl.u32 2102212464, %v146
    %v156 = vor.u32 %v154, %v155
    %v157 = vshll.u32 2102212464, %v145
    %v158 = vshrl.u32 920167782, %v146
    %v159 = vor.u32 %v157, %v158
    %v160 = vshll.u32 920167782, %v145
    %v161 = vshrl.u32 1326507024, %v146
    %v162 = vor.u32 %v160, %v161
    %vm163 = vcmp.lt.s32.totalorder %v144, 1
    %vm164 = vcmp.lt.s32.totalorder %v144, 2
    %vm165 = vcmp.lt.s32.totalorder %v144, 3
    %vm166 = vcmp.lt.s32.totalorder %v144, 4
    %v167 = vsel %vm163, %v147, %v150
    %v168 = vsel %vm166, %v156, 2102212464
    %v169 = vsel %vm165, %v153, %v168
    %v170 = vsel %vm164, %v167, %v169
    %v171 = vsel %vm163, %v150, %v153
    %v172 = vsel %vm166, %v159, 920167782
    %v173 = vsel %vm165, %v156, %v172
    %v174 = vsel %vm164, %v171, %v173
    %v175 = vsel %vm163, %v153, %v156
    %v176 = vsel %vm166, %v162, 1326507024
    %v177 = vsel %vm165, %v159, %v176
    %v178 = vsel %vm164, %v175, %v177
    %v179 = vshll.u32 %v139, 8
    %v180 = vmul.u32.u64.compose %v179, %v178
    %v181 = vextract.low.u32 %v180
    %v182 = vextract.high.u32 %v180
    %v183 = vmul.u32.u64.compose %v179, %v174
    %v184 = vextract.low.u32 %v183
    %v185 = vextract.high.u32 %v183
    %v186 = vmul.u32 %v179, %v170
    %v187 = vadd.s32 %v182, %v184
    %vm188 = vc.u32 %v182, %v184
    %v189 = vadd.s32 %v185, 1
    %v190 = vsel %vm188, %v189, %v185
    %v191 = vadd.s32 %v186, %v190
    %v192 = vadd.s32 %v191, 536870912
    %v193 = vshrl.u32 %v192, 30
    %v194 = vshll.u32 %v193, 30
    %v195 = vsub.s32 %v191, %v194
    %vm196 = vcmp.lt.s32.totalorder %v195, 0
    %v197 = vsub.s32 0, %v195
    %v198 = vsel %vm196, %v197, %v195
    %v199 = vclz %v198
    %v200 = vsub.s32 %v199, 2
    %vm201 = vcmp.gt.s32.totalorder 0, %v200
    %v202 = vsel %vm201, 0, %v200
    %v203 = vsub.s32 32, %v202
    %v204 = vshll.u32 %v195, %v202
    %v205 = vshrl.u32 %v187, %v203
    %v206 = vor.u32 %v204, %v205
    %v207 = vsub.s32 4294967266, %v202
    %v208 = vadd.s32 %v207, 127
    %v209 = vshll.u32 %v208, 23
    %v210 = vor.u32 4788187, %v209
    %v211 = vand.u32 2147483647, %v210
    %v213 = vcvt.s32.f32 %v206
    %v214 = vmul.f32 %v213, %v211
    %v215 = vxor.u32 %v214, 2147483648
    %v216 = vsel %vm133, %v215, %v214
    %v217 = vsub.s32 4, %v193
    %v218 = vsel %vm133, %v217, %v193
    %v219 = vsel %vm132, %v24, %v216
    %v220 = vsel %vm132, 0, %v218
    %v221 = vcosq.f32.pop %v219
    %v222 = vsinq.f32.pop %v219
    %vm223 = vweird.f32 %v24
    %v224 = vadd.s32 %v220, 3
    %v225 = vand.u32 %v224, 3
    %vm226 = vcmp.lt.s32.totalorder %v225, 2
    %vm227 = vcmp.eq.s32.totalorder %v225, 0
    %v228 = vxor.u32 %v222, 2147483648
    %v229 = vsel %vm227, %v221, %v228
    %vm230 = vcmp.eq.s32.totalorder %v225, 2
    %v231 = vxor.u32 %v221, 2147483648
    %v232 = vsel %vm230, %v231, %v222
    %v233 = vsel %vm226, %v229, %v232
    %v234 = vsel %vm223, nan, %v233
    %v235 = vand.u32 2147483647, %v23
    %vm236 = vcmp.le.f32.partialorder %v235, 0.7853982
    %vm237 = vcmp.lt.s32.totalorder %v23, 0
    %v238 = vand.u32 %v23, 2139095040
    %v239 = vshrl.u32 %v238, 23
    %v240 = vsub.s32 %v239, 127
    %v241 = vand.u32 2147483647, %v23
    %v242 = vand.u32 %v241, 8388607
    %v243 = vor.u32 %v242, 8388608
    %v244 = vsub.s32 0, %v243
    %v245 = vadd.s32 %v240, 1
    %vm246 = vcmp.gt.s32.totalorder %v245, 0
    %v247 = vsel %vm246, %v245, 0
    %v248 = vshrl.u32 %v247, 5
    %v249 = vand.u32 %v247, 31
    %v250 = vsub.s32 32, %v249
    %v251 = vshrl.u32 683565275, %v250
    %v252 = vshll.u32 683565275, %v249
    %v253 = vshrl.u32 2475754826, %v250
    %v254 = vor.u32 %v252, %v253
    %v255 = vshll.u32 2475754826, %v249
    %v256 = vshrl.u32 2131351028, %v250
    %v257 = vor.u32 %v255, %v256
    %v258 = vshll.u32 2131351028, %v249
    %v259 = vshrl.u32 2102212464, %v250
    %v260 = vor.u32 %v258, %v259
    %v261 = vshll.u32 2102212464, %v249
    %v262 = vshrl.u32 920167782, %v250
    %v263 = vor.u32 %v261, %v262
    %v264 = vshll.u32 920167782, %v249
    %v265 = vshrl.u32 1326507024, %v250
    %v266 = vor.u32 %v264, %v265
    %vm267 = vcmp.lt.s32.totalorder %v248, 1
    %vm268 = vcmp.lt.s32.totalorder %v248, 2
    %vm269 = vcmp.lt.s32.totalorder %v248, 3
    %vm270 = vcmp.lt.s32.totalorder %v248, 4
    %v271 = vsel %vm267, %v251, %v254
    %v272 = vsel %vm270, %v260, 2102212464
    %v273 = vsel %vm269, %v257, %v272
    %v274 = vsel %vm268, %v271, %v273
    %v275 = vsel %vm267, %v254, %v257
    %v276 = vsel %vm270, %v263, 920167782
    %v277 = vsel %vm269, %v260, %v276
    %v278 = vsel %vm268, %v275, %v277
    %v279 = vsel %vm267, %v257, %v260
    %v280 = vsel %vm270, %v266, 1326507024
    %v281 = vsel %vm269, %v263, %v280
    %v282 = vsel %vm268, %v279, %v281
    %v283 = vshll.u32 %v243, 8
    %v284 = vmul.u32.u64.compose %v283, %v282
    %v285 = vextract.low.u32 %v284
    %v286 = vextract.high.u32 %v284
    %v287 = vmul.u32.u64.compose %v283, %v278
    %v288 = vextract.low.u32 %v287
    %v289 = vextract.high.u32 %v287
    %v290 = vmul.u32 %v283, %v274
    %v291 = vadd.s32 %v286, %v288
    %vm292 = vc.u32 %v286, %v288
    %v293 = vadd.s32 %v289, 1
    %v294 = vsel %vm292, %v293, %v289
    %v295 = vadd.s32 %v290, %v294
    %v296 = vadd.s32 %v295, 536870912
    %v297 = vshrl.u32 %v296, 30
    %v298 = vshll.u32 %v297, 30
    %v299 = vsub.s32 %v295, %v298
    %vm300 = vcmp.lt.s32.totalorder %v299, 0
    %v301 = vsub.s32 0, %v299
    %v302 = vsel %vm300, %v301, %v299
    %v303 = vclz %v302
    %v304 = vsub.s32 %v303, 2
    %vm305 = vcmp.gt.s32.totalorder 0, %v304
    %v306 = vsel %vm305, 0, %v304
    %v307 = vsub.s32 32, %v306
    %v308 = vshll.u32 %v299, %v306
    %v309 = vshrl.u32 %v291, %v307
    %v310 = vor.u32 %v308, %v309
    %v311 = vsub.s32 4294967266, %v306
    %v312 = vadd.s32 %v311, 127
    %v313 = vshll.u32 %v312, 23
    %v314 = vor.u32 4788187, %v313
    %v315 = vand.u32 2147483647, %v314
    %v317 = vcvt.s32.f32 %v310
    %v318 = vmul.f32 %v317, %v315
    %v319 = vxor.u32 %v318, 2147483648
    %v320 = vsel %vm237, %v319, %v318
    %v321 = vsub.s32 4, %v297
    %v322 = vsel %vm237, %v321, %v297
    %v323 = vsel %vm236, %v23, %v320
    %v324 = vsel %vm236, 0, %v322
    %v325 = vcosq.f32.pop %v323
    %v326 = vsinq.f32.pop %v323
    %vm327 = vweird.f32 %v23
    %v328 = vand.u32 %v324, 3
    %vm329 = vcmp.lt.s32.totalorder %v328, 2
    %vm330 = vcmp.eq.s32.totalorder %v328, 0
    %v331 = vxor.u32 %v326, 2147483648
    %v332 = vsel %vm330, %v325, %v331
    %vm333 = vcmp.eq.s32.totalorder %v328, 2
    %v334 = vxor.u32 %v325, 2147483648
    %v335 = vsel %vm333, %v334, %v326
    %v336 = vsel %vm329, %v332, %v335
    %v337 = vsel %vm327, nan, %v336
    %v338 = vand.u32 2147483647, %v24
    %vm339 = vcmp.le.f32.partialorder %v338, 0.7853982
    %vm340 = vcmp.lt.s32.totalorder %v24, 0
    %v341 = vand.u32 %v24, 2139095040
    %v342 = vshrl.u32 %v341, 23
    %v343 = vsub.s32 %v342, 127
    %v344 = vand.u32 2147483647, %v24
    %v345 = vand.u32 %v344, 8388607
    %v346 = vor.u32 %v345, 8388608
    %v347 = vsub.s32 0, %v346
    %v348 = vadd.s32 %v343, 1
    %vm349 = vcmp.gt.s32.totalorder %v348, 0
    %v350 = vsel %vm349, %v348, 0
    %v351 = vshrl.u32 %v350, 5
    %v352 = vand.u32 %v350, 31
    %v353 = vsub.s32 32, %v352
    %v354 = vshrl.u32 683565275, %v353
    %v355 = vshll.u32 683565275, %v352
    %v356 = vshrl.u32 2475754826, %v353
    %v357 = vor.u32 %v355, %v356
    %v358 = vshll.u32 2475754826, %v352
    %v359 = vshrl.u32 2131351028, %v353
    %v360 = vor.u32 %v358, %v359
    %v361 = vshll.u32 2131351028, %v352
    %v362 = vshrl.u32 2102212464, %v353
    %v363 = vor.u32 %v361, %v362
    %v364 = vshll.u32 2102212464, %v352
    %v365 = vshrl.u32 920167782, %v353
    %v366 = vor.u32 %v364, %v365
    %v367 = vshll.u32 920167782, %v352
    %v368 = vshrl.u32 1326507024, %v353
    %v369 = vor.u32 %v367, %v368
    %vm370 = vcmp.lt.s32.totalorder %v351, 1
    %vm371 = vcmp.lt.s32.totalorder %v351, 2
    %vm372 = vcmp.lt.s32.totalorder %v351, 3
    %vm373 = vcmp.lt.s32.totalorder %v351, 4
    %v374 = vsel %vm370, %v354, %v357
    %v375 = vsel %vm373, %v363, 2102212464
    %v376 = vsel %vm372, %v360, %v375
    %v377 = vsel %vm371, %v374, %v376
    %v378 = vsel %vm370, %v357, %v360
    %v379 = vsel %vm373, %v366, 920167782
    %v380 = vsel %vm372, %v363, %v379
    %v381 = vsel %vm371, %v378, %v380
    %v382 = vsel %vm370, %v360, %v363
    %v383 = vsel %vm373, %v369, 1326507024
    %v384 = vsel %vm372, %v366, %v383
    %v385 = vsel %vm371, %v382, %v384
    %v386 = vshll.u32 %v346, 8
    %v387 = vmul.u32.u64.compose %v386, %v385
    %v388 = vextract.low.u32 %v387
    %v389 = vextract.high.u32 %v387
    %v390 = vmul.u32.u64.compose %v386, %v381
    %v391 = vextract.low.u32 %v390
    %v392 = vextract.high.u32 %v390
    %v393 = vmul.u32 %v386, %v377
    %v394 = vadd.s32 %v389, %v391
    %vm395 = vc.u32 %v389, %v391
    %v396 = vadd.s32 %v392, 1
    %v397 = vsel %vm395, %v396, %v392
    %v398 = vadd.s32 %v393, %v397
    %v399 = vadd.s32 %v398, 536870912
    %v400 = vshrl.u32 %v399, 30
    %v401 = vshll.u32 %v400, 30
    %v402 = vsub.s32 %v398, %v401
    %vm403 = vcmp.lt.s32.totalorder %v402, 0
    %v404 = vsub.s32 0, %v402
    %v405 = vsel %vm403, %v404, %v402
    %v406 = vclz %v405
    %v407 = vsub.s32 %v406, 2
    %vm408 = vcmp.gt.s32.totalorder 0, %v407
    %v409 = vsel %vm408, 0, %v407
    %v410 = vsub.s32 32, %v409
    %v411 = vshll.u32 %v402, %v409
    %v412 = vshrl.u32 %v394, %v410
    %v413 = vor.u32 %v411, %v412
    %v414 = vsub.s32 4294967266, %v409
    %v415 = vadd.s32 %v414, 127
    %v416 = vshll.u32 %v415, 23
    %v417 = vor.u32 4788187, %v416
    %v418 = vand.u32 2147483647, %v417
    %v420 = vcvt.s32.f32 %v413
    %v421 = vmul.f32 %v420, %v418
    %v422 = vxor.u32 %v421, 2147483648
    %v423 = vsel %vm340, %v422, %v421
    %v424 = vsub.s32 4, %v400
    %v425 = vsel %vm340, %v424, %v400
    %v426 = vsel %vm339, %v24, %v423
    %v427 = vsel %vm339, 0, %v425
    %v428 = vcosq.f32.pop %v426
    %v429 = vsinq.f32.pop %v426
    %vm430 = vweird.f32 %v24
    %v431 = vand.u32 %v427, 3
    %vm432 = vcmp.lt.s32.totalorder %v431, 2
    %vm433 = vcmp.eq.s32.totalorder %v431, 0
    %v434 = vxor.u32 %v429, 2147483648
    %v435 = vsel %vm433, %v428, %v434
    %vm436 = vcmp.eq.s32.totalorder %v431, 2
    %v437 = vxor.u32 %v428, 2147483648
    %v438 = vsel %vm436, %v437, %v429
    %v439 = vsel %vm432, %v435, %v438
    %v440 = vsel %vm430, nan, %v439
    %s441 = sadd.s32 0, 16
    %s442 = scalar_lea.vmem [#allocation5], %s441
    %443 = vst [vmem:[%s442] sm:$0xff] %v130
    %444 = vst [vmem:[%s442 + $0x8] sm:$0xff] %v234
    %s445 = sadd.s32 0, 32
    %s446 = scalar_lea.vmem [#allocation5], %s445
    %447 = vst [vmem:[%s446] sm:$0xff] %v337
    %448 = vst [vmem:[%s446 + $0x8] sm:$0xff] %v440
    %v449 = vmul.f32 %v130, 2.0
    %v450 = vmul.f32 %v234, 2.0
    %v451 = vmul.f32 %v449, %v337
    %v452 = vmul.f32 %v450, %v440
    %v453 = vmul.f32 %v449, %v130
    %v454 = vmul.f32 %v450, %v234
    %v455 = vsub.f32 1.0, %v453
    %v456 = vsub.f32 1.0, %v454
    %s457 = sadd.s32 0, 48
    %s458 = scalar_lea.vmem [#allocation5], %s457
    %459 = vst [vmem:[%s458] sm:$0xff] %v451
    %460 = vst [vmem:[%s458 + $0x8] sm:$0xff] %v452
    %s461 = sadd.s32 0, 64
    %s462 = scalar_lea.vmem [#allocation5], %s461
    %463 = vst [vmem:[%s462] sm:$0xff] %v455
    %464 = vst [vmem:[%s462 + $0x8] sm:$0xff] %v456
    %v465 = vmul.f32 %v451, 2.0
    %v466 = vmul.f32 %v452, 2.0
    %v467 = vmul.f32 %v465, %v455
    %v468 = vmul.f32 %v466, %v456
    %v469 = vmul.f32 %v465, %v451
    %v470 = vmul.f32 %v466, %v452
    %v471 = vsub.f32 1.0, %v469
    %v472 = vsub.f32 1.0, %v470
    %s473 = sadd.s32 0, 80
    %s474 = scalar_lea.vmem [#allocation5], %s473
    %475 = vst [vmem:[%s474] sm:$0xff] %v467
    %476 = vst [vmem:[%s474 + $0x8] sm:$0xff] %v468
    %s477 = sadd.s32 0, 96
    %s478 = scalar_lea.vmem [#allocation5], %s477
    %479 = vst [vmem:[%s478] sm:$0xff] %v471
    %480 = vst [vmem:[%s478 + $0x8] sm:$0xff] %v472
    %v481 = vmul.f32 %v467, 2.0
    %v482 = vmul.f32 %v468, 2.0
    %v483 = vmul.f32 %v481, %v471
    %v484 = vmul.f32 %v482, %v472
    %v485 = vmul.f32 %v481, %v467
    %v486 = vmul.f32 %v482, %v468
    %v487 = vsub.f32 1.0, %v485
    %v488 = vsub.f32 1.0, %v486
    %s489 = sadd.s32 0, 112
    %s490 = scalar_lea.vmem [#allocation5], %s489
    %491 = vst [vmem:[%s490] sm:$0xff] %v483
    %492 = vst [vmem:[%s490 + $0x8] sm:$0xff] %v484
    %s493 = sadd.s32 0, 128
    %s494 = scalar_lea.vmem [#allocation5], %s493
    %495 = vst [vmem:[%s494] sm:$0xff] %v487
    %496 = vst [vmem:[%s494 + $0x8] sm:$0xff] %v488
    %v497 = vmul.f32 %v483, 2.0
    %v498 = vmul.f32 %v484, 2.0
    %v499 = vmul.f32 %v497, %v487
    %v500 = vmul.f32 %v498, %v488
    %v501 = vmul.f32 %v497, %v483
    %v502 = vmul.f32 %v498, %v484
    %v503 = vsub.f32 1.0, %v501
    %v504 = vsub.f32 1.0, %v502
    %s505 = sadd.s32 0, 144
    %s506 = scalar_lea.vmem [#allocation5], %s505
    %507 = vst [vmem:[%s506] sm:$0xff] %v499
    %508 = vst [vmem:[%s506 + $0x8] sm:$0xff] %v500
    %s509 = sadd.s32 0, 160
    %s510 = scalar_lea.vmem [#allocation5], %s509
    %511 = vst [vmem:[%s510] sm:$0xff] %v503
    %512 = vst [vmem:[%s510 + $0x8] sm:$0xff] %v504
    %v513 = vmul.f32 %v499, 2.0
    %v514 = vmul.f32 %v500, 2.0
    %v515 = vmul.f32 %v513, %v503
    %v516 = vmul.f32 %v514, %v504
    %v517 = vmul.f32 %v513, %v499
    %v518 = vmul.f32 %v514, %v500
    %v519 = vsub.f32 1.0, %v517
    %v520 = vsub.f32 1.0, %v518
    %s521 = sadd.s32 0, 176
    %s522 = scalar_lea.vmem [#allocation5], %s521
    %523 = vst [vmem:[%s522] sm:$0xff] %v515
    %524 = vst [vmem:[%s522 + $0x8] sm:$0xff] %v516
    %s525 = sadd.s32 0, 192
    %s526 = scalar_lea.vmem [#allocation5], %s525
    %527 = vst [vmem:[%s526] sm:$0xff] %v519
    %528 = vst [vmem:[%s526 + $0x8] sm:$0xff] %v520
    // Predicated region
    $region10: #{tpu_custom_call.1} parent=1 // pred_check
      _
    $region11: #{tpu_custom_call.1} parent=1 // pred_check_branch
      %530 = sbr.rel (0) target = $region13
    $region12: #{tpu_custom_call.1} parent=1 // pred_region
      %s532 = ssub.s32 3328, 3328
      %533 = vsyncadd [#allocation4], %s532
      %s534 = sshll.u32 [#allocation5], 4
      %s535 = int_to_ptr.vmem [resolvable:$true] %s534
      %540 = dma.vmem_to_hbm [thread:$0]  %s535, 3328, %s1, [#allocation4], 128, 128, 8
    $region13: #{tpu_custom_call.1} parent=1 // pred_fallthru
      _
    // Predicated region
    $region14: #{tpu_custom_call.1} parent=1 // pred_check
      _
    $region15: #{tpu_custom_call.1} parent=1 // pred_check_branch
      %542 = sbr.rel (0) target = $region17
    $region16: #{tpu_custom_call.1} parent=1 // pred_region
      %543 = dma.done [#allocation4], 3328
    $region17: #{tpu_custom_call.1} parent=1 // pred_fallthru
      _
    %544 = vsyncpa [#allocation3], 1
    %545 = vsyncpa [#allocation4], 1

</llo_original>
